<compile_context>
chip_gen: v7x
topology: tpu7x:2x2x1
jax: 0.10.0
libtpu: 0.0.40
codegen_flags: <defaults>
</compile_context>

<pallas_src>
import jax
import jax.numpy as jnp
from jax.experimental import pallas as pl
from jax.experimental.pallas import tpu as pltpu

# mirrors the `global indices_list_all` in the PyTorch source
indices_list_all = []

_LANE = 128
# per-buffer weight tile budget; ~16 MiB double-buffered -> fits v7x's 64 MiB VMEM
_WEIGHT_TILE_BUDGET = 8 * 1024 * 1024
_VMEM_LIMIT_BYTES = 48 * 1024 * 1024      # < 64 MiB physical on v7x, ample on v5e/v6e


# ----------------------------- Pallas kernels ------------------------------ #
def _matmul_single_k_kernel(x_ref, wt_ref, o_ref):
    """Single K block: out[M, tn] = x[M, K] @ wT[K, tn] in one shot (no acc)."""
    o_ref[...] = jax.lax.dot_general(
        x_ref[...], wt_ref[...],
        dimension_numbers=(((1,), (0,)), ((), ())),
        preferred_element_type=jnp.float32,
    ).astype(o_ref.dtype)


def _matmul_multi_k_f32out_kernel(x_ref, wt_ref, o_ref):
    """K-tiled, f32 output: accumulate directly into the K-resident output block."""
    @pl.when(pl.program_id(1) == 0)
    def _init():
        o_ref[...] = jnp.zeros_like(o_ref)

    o_ref[...] += jax.lax.dot_general(
        x_ref[...], wt_ref[...],
        dimension_numbers=(((1,), (0,)), ((), ())),
        preferred_element_type=jnp.float32,
    )


def _matmul_multi_k_acc_kernel(x_ref, wt_ref, o_ref, acc_ref):
    """K-tiled, narrow output dtype: f32 scratch accumulator, cast at the end."""
    @pl.when(pl.program_id(1) == 0)
    def _init():
        acc_ref[...] = jnp.zeros_like(acc_ref)

    acc_ref[...] += jax.lax.dot_general(
        x_ref[...], wt_ref[...],
        dimension_numbers=(((1,), (0,)), ((), ())),
        preferred_element_type=jnp.float32,
    )

    @pl.when(pl.program_id(1) == pl.num_programs(1) - 1)
    def _store():
        o_ref[...] = acc_ref[...].astype(o_ref.dtype)


def _choose_tiles(K, N, w_itemsize, budget_bytes):
    """Pick (tn, tk) for the (K, N) weight stream under a per-buffer VMEM budget."""
    # ---- tn (lane tile of weight / output) ----
    if N % _LANE != 0:
        tn = N                                  # only legal option (full-N block)
    else:
        # largest multiple-of-128 divisor of N, capped at 512 and capped so that
        # N/tn >= 2 when N > 128 (keeps >=2 parallel N blocks for megacore / v7x).
        cap = min(512, N // 2) if N > _LANE else N
        cap = max(cap, _LANE)
        tn = _LANE
        d = 2 * _LANE
        while d <= cap:
            if N % d == 0:
                tn = d
            d += _LANE
    # ---- tk (reduction tile) ----
    if K * tn * w_itemsize <= budget_bytes or K % _LANE != 0:
        tk = K                                  # single K block -> no accumulator
    else:
        max_tk = max(_LANE, (budget_bytes // (tn * w_itemsize)) // _LANE * _LANE)
        tk = _LANE
        d = 2 * _LANE
        while d <= min(K, max_tk):
            if K % d == 0:
                tk = d
            d += _LANE
    return tn, tk


def matmul_x_wt(x2d, wt, out_dtype=None, *, weight_tile_budget=_WEIGHT_TILE_BUDGET):
    """Pallas TPU matmul: (M, K) @ (K, N) -> (M, N), tuned for skinny M (GEMV)."""
    M, K = x2d.shape
    Kw, N = wt.shape
    assert K == Kw, (x2d.shape, wt.shape)
    out_dtype = jnp.dtype(out_dtype or x2d.dtype)

    tn, tk = _choose_tiles(K, N, jnp.dtype(wt.dtype).itemsize, weight_tile_budget)
    n_n = N // tn
    n_k = K // tk

    if n_k == 1:
        # Single K block: no reduction axis, no accumulator, no predicated epilogue.
        return pl.pallas_call(
            _matmul_single_k_kernel,
            out_shape=jax.ShapeDtypeStruct((M, N), out_dtype),
            grid_spec=pltpu.PrefetchScalarGridSpec(
                num_scalar_prefetch=0,
                grid=(n_n,),
                in_specs=[
                    pl.BlockSpec((M, K), lambda j: (0, 0)),
                    pl.BlockSpec((K, tn), lambda j: (0, j)),
                ],
                out_specs=pl.BlockSpec((M, tn), lambda j: (0, j)),
            ),
            compiler_params=pltpu.CompilerParams(
                dimension_semantics=("parallel",),
                vmem_limit_bytes=_VMEM_LIMIT_BYTES),
        )(x2d, wt)

    # K-tiled path (reduction axis last).  For f32 output, accumulate directly
    # into the K-resident output block (no scratch).
    if out_dtype == jnp.float32:
        kernel = _matmul_multi_k_f32out_kernel
        scratch = []
    else:
        kernel = _matmul_multi_k_acc_kernel
        scratch = [pltpu.VMEM((M, tn), jnp.float32)]

    return pl.pallas_call(
        kernel,
        out_shape=jax.ShapeDtypeStruct((M, N), out_dtype),
        grid_spec=pltpu.PrefetchScalarGridSpec(
            num_scalar_prefetch=0,
            grid=(n_n, n_k),
            in_specs=[
                pl.BlockSpec((M, tk), lambda j, k: (0, k)),
                pl.BlockSpec((tk, tn), lambda j, k: (k, j)),
            ],
            out_specs=pl.BlockSpec((M, tn), lambda j, k: (0, j)),
            scratch_shapes=scratch,
        ),
        compiler_params=pltpu.CompilerParams(
            dimension_semantics=("parallel", "arbitrary"),
            vmem_limit_bytes=_VMEM_LIMIT_BYTES),
    )(x2d, wt)


# ------------------------------- DownLayer --------------------------------- #
class DownLayer:
    def __init__(self, weight, num, sparsity, token_sparsity, memory_limit, name=None):
        weight = jnp.asarray(weight)                 # (d_out, d_in), nn.Linear layout
        self.d_out, self.d_in = weight.shape
        self.neuron_num = int(self.d_in * sparsity)
        self.memory_limit = memory_limit
        self.num = num
        self.token_sparsity = token_sparsity
        self.weight_updated = True
        # Weight stored pre-transposed (K, N) in bf16: the kernel is HBM-bound on
        # the weight stream, so 2-byte weights + a standard contraction layout.
        # TODO(synk): torch.float16 replaced with bfloat16 (no efficient fp16 MXU on TPU).
        self.weight_t = weight.T.astype(jnp.bfloat16)            # (d_in, d_out)
        # filtered weight, pre-transposed, STATIC (neuron_num, d_out) shape
        self.filtered_W_t = jnp.zeros((self.neuron_num, self.d_out), jnp.bfloat16)
        self.indices_all = jnp.zeros((self.neuron_num,), jnp.int32)
        # TODO(synk): the .cpu()/.cuda() placement shuffling of the torch version
        # (memory_limit branch) is a host/device memory detail with no TPU Pallas
        # equivalent; skipped.

    @property
    def filtered_W(self):
        # original-orientation view (d_out, neuron_num) for API parity
        return self.filtered_W_t.T

    def forward(self, x):
        global indices_list_all
        x = jnp.asarray(x)
        B, S, K = x.shape
        if S > 1:
            # ------------------- prefill: full matmul + neuron selection ----------
            self.weight_updated = False
            assert K == self.d_in
            x2d = x.reshape(B * S, K)
            true_value = matmul_x_wt(
                x2d.astype(jnp.bfloat16), self.weight_t, out_dtype=jnp.float32
            ).reshape(B, S, self.d_out)

            # ---- neuron selection, fully on device (no host round trip) ----
            xv = x.reshape(B * S, K)                # works for any B (fixes squeeze bug)
            T = B * S
            order = jnp.argsort(-xv, axis=1)        # descending, stable
            ranks = jnp.argsort(order, axis=1)      # per-token rank of each neuron
            pos = (xv > 0).sum()
            limit = jnp.floor(self.token_sparsity * pos / T).astype(jnp.int32)
            counts = (ranks < limit).sum(axis=0)    # how many tokens pick each neuron
            top_counts, top_idx = jax.lax.top_k(counts, self.neuron_num)
            valid = top_counts > 0
            gathered = jnp.take(self.weight_t, top_idx, axis=0)   # (neuron_num, d_out)
            # TODO(synk): when fewer than neuron_num neurons are active, the torch
            # version shrinks filtered_W; here the shape stays static and the padded
            # columns are zeroed instead (keeps one compiled decode kernel hot).
            self.filtered_W_t = jnp.where(valid[:, None], gathered,
                                          jnp.zeros_like(gathered))
            self.indices_all = top_idx

            if self.num == 6:
                indices_list_all = []
            indices_list_all.append(top_idx)
            return true_value
        else:
            # ------------------- decode: matmul against filtered weight -----------
            assert K == self.neuron_num, (K, self.neuron_num)
            x2d = x.reshape(B * S, K).astype(jnp.bfloat16)
            out = matmul_x_wt(x2d, self.filtered_W_t, out_dtype=jnp.bfloat16)
            return out.reshape(B, S, self.d_out)


# ---------------------------------- main ------------------------------------ #
if __name__ == "__main__":
    key = jax.random.PRNGKey(0)
    kw, kx, kd = jax.random.split(key, 3)

    D_OUT, D_IN = 128, 256            # (hidden, intermediate) of the down_proj
    B, S = 1, 8

    weight = jax.random.normal(kw, (D_OUT, D_IN), dtype=jnp.float32)
    layer = DownLayer(weight, num=6, sparsity=0.5, token_sparsity=0.5,
                      memory_limit=False)

    # ---- prefill (seq > 1): full matmul + neuron selection ----
    x_prefill = jax.random.normal(kx, (B, S, D_IN), dtype=jnp.float32)
    y_prefill = layer.forward(x_prefill)
    jax.block_until_ready(y_prefill)
    assert y_prefill.shape == (B, S, D_OUT)

    # reference at the same operand precision (weights are streamed as bf16)
    ref = jnp.einsum("bsk,kn->bsn",
                     x_prefill.astype(jnp.bfloat16), layer.weight_t,
                     preferred_element_type=jnp.float32)
    assert jnp.allclose(y_prefill, ref, atol=5e-2, rtol=5e-2)

    # ---- decode (seq == 1): input restricted to the selected neurons ----
    nf = layer.filtered_W.shape[1]
    assert nf == layer.neuron_num            # static shape -> no decode recompiles
    x_decode = jax.random.normal(kd, (B, 1, nf), dtype=jnp.float32)
    y_decode = layer.forward(x_decode)
    jax.block_until_ready(y_decode)
    assert y_decode.shape == (B, 1, D_OUT)

    ref_dec = jnp.einsum("bsk,kn->bsn",
                         x_decode.astype(jnp.bfloat16), layer.filtered_W_t,
                         preferred_element_type=jnp.float32)
    assert jnp.allclose(y_decode.astype(jnp.float32), ref_dec, atol=2e-1, rtol=2e-1)

    # ---- also exercise the K-tiled (multi-block reduction) kernel path ----
    M2, K2, N2 = 8, 512, 256
    a = jax.random.normal(jax.random.PRNGKey(1), (M2, K2), jnp.float32).astype(jnp.bfloat16)
    wt2 = jax.random.normal(jax.random.PRNGKey(2), (K2, N2), jnp.float32).astype(jnp.bfloat16)
    # small forced budget -> tk < K2 -> multi-K kernel with direct f32 accumulation
    out_tiled = matmul_x_wt(a, wt2, out_dtype=jnp.float32,
                            weight_tile_budget=(K2 * 128 * 2) // 2)
    jax.block_until_ready(out_tiled)
    ref2 = jnp.dot(a, wt2, preferred_element_type=jnp.float32)
    assert jnp.allclose(out_tiled, ref2, atol=5e-2, rtol=5e-2)

    print("KERNEL_OK")
</pallas_src>

<mosaic_0001>
module attributes {stable_mosaic.version = 11 : i64} {
  func.func @_matmul_single_k_kernel(%arg0: i32, %arg1: memref<8x256xbf16, #tpu.memory_space<vmem>>, %arg2: memref<256x128xbf16, #tpu.memory_space<vmem>>, %arg3: memref<8x128xf32, #tpu.memory_space<vmem>>) attributes {dimension_semantics = [#tpu.dimension_semantics<parallel>], iteration_bounds = array<i64: 1>, scalar_prefetch = 0 : i64, scratch_operands = 0 : i64, tpu.core_type = #tpu.core_type<tc>, window_params = [{pipeline_mode = #tpu.pipeline_mode<synchronous>, transform_indices = @transform_0, window_bounds = array<i64: 8, 256>}, {transform_indices = @transform_1, window_bounds = array<i64: 256, 128>}, {transform_indices = @transform_2, window_bounds = array<i64: 8, 128>}]} {
    %c0 = arith.constant 0 : index
    %c0_0 = arith.constant 0 : index
    %0 = vector.load %arg1[%c0, %c0_0] : memref<8x256xbf16, #tpu.memory_space<vmem>>, vector<8x256xbf16>
    %c0_1 = arith.constant 0 : index
    %c0_2 = arith.constant 0 : index
    %1 = vector.load %arg2[%c0_1, %c0_2] : memref<256x128xbf16, #tpu.memory_space<vmem>>, vector<256x128xbf16>
    %cst = arith.constant dense<0.000000e+00> : vector<8x128xf32>
    %2 = tpu.matmul %0, %1, %cst {dimension_numbers = #tpu.dot_dimension_numbers<[1], [0], [0], [1], [0, 0, 1, 1], [], []>} : vector<8x256xbf16>, vector<256x128xbf16>, vector<8x128xf32> -> vector<8x128xf32>
    %c0_3 = arith.constant 0 : index
    %c0_4 = arith.constant 0 : index
    %3 = vector.load %arg3[%c0_3, %c0_4] : memref<8x128xf32, #tpu.memory_space<vmem>>, vector<8x128xf32>
    tpu.vector_store %arg3[%c0_3, %c0_4], %2 {strides = array<i32>} : memref<8x128xf32, #tpu.memory_space<vmem>>, vector<8x128xf32>,
    return
  }
  func.func @transform_0(%arg0: i32) -> (i32, i32) {
    %c0_i32 = arith.constant 0 : i32
    %c0_i32_0 = arith.constant 0 : i32
    %c0_i32_1 = arith.constant 0 : i32
    return %c0_i32, %c0_i32_0 : i32, i32
  }
  func.func @transform_1(%arg0: i32) -> (i32, i32) {
    %c0_i32 = arith.constant 0 : i32
    %c0_i32_0 = arith.constant 0 : i32
    return %c0_i32, %arg0 : i32, i32
  }
  func.func @transform_2(%arg0: i32) -> (i32, i32) {
    %c0_i32 = arith.constant 0 : i32
    %c0_i32_0 = arith.constant 0 : i32
    return %c0_i32, %arg0 : i32, i32
  }
}

</mosaic_0001>

<llo_original>
// kernel: tpu_custom_call.1
$region0: #{tpu_custom_call.1}
  #allocation0 [shape = 'u32[]', space=smem, size = 0x4, offset = 0x4, fixed_abs, tag = 'smem constant byte address 0x4 - core index']
  #allocation1 [shape = 'u32[144,128]{1,0:T(1,128)}', space=vmem, size = 0x12000, scoped, tag = 'internal scratch']
  %s0 = inlined_call_operand.hbm [shape: bf16[8,256], index: 0, kind: input, shape index: {}]
  %s1 = inlined_call_operand.hbm [shape: bf16[256,128], index: 1, kind: input, shape index: {}]
  %s2 = inlined_call_operand.hbm [shape: f32[8,128], index: 2, kind: output, shape index: {}]
  %s3 = sld [smem:[#allocation0]]
  $region26: #{tpu_custom_call.1} parent=0
    _
  %s5 = ssub.s32 1, %s3
  %s6 = scalar_select 0, %s5, %s3
  $region1: #{tpu_custom_call.1} parent=0
    #allocation2 [shape = 'u8[4096]{0}', space=vmem, size = 0x1000, scoped, tag = 'input window, operand 0, single buffered']
    #allocation3 [shape = 's32[1]{0}', space=sflag, size = 0x4, scoped, tag = 'scoped memory for tpu_custom_call.1']
    #allocation4 [shape = 's32[1]{0}', space=sflag, size = 0x4, scoped, tag = 'scoped memory for tpu_custom_call.1']
    #allocation5 [shape = 'u8[65536]{0}', space=vmem, size = 0x10000, scoped, tag = 'input window, operand 1, single buffered']
    #allocation6 [shape = 's32[1]{0}', space=sflag, size = 0x4, scoped, tag = 'scoped memory for tpu_custom_call.1']
    #allocation7 [shape = 'u8[4096]{0}', space=vmem, size = 0x1000, scoped, tag = 'output window, operand 0, single buffered']
    %7 = vsyncpa [#allocation3], 0
    %8 = vsyncpa [#allocation6], 0
    %9 = vsyncpa [#allocation4], 0
    // Predicated region
    $region2: #{tpu_custom_call.1} parent=1 // pred_check
      _
    $region3: #{tpu_custom_call.1} parent=1 // pred_check_branch
      %11 = sbr.rel (0) target = $region5
    $region4: #{tpu_custom_call.1} parent=1 // pred_region
      %s13 = ssub.s32 128, 128
      %14 = vsyncadd [#allocation3], %s13
      %s16 = sshll.u32 [#allocation2], 4
      %s17 = int_to_ptr.vmem [resolvable:$true] %s16
      %19 = dma.hbm_to_vmem [thread:$0]  %s0, 128, %s17, [#allocation3]
    $region5: #{tpu_custom_call.1} parent=1 // pred_fallthru
      _
    // Predicated region
    $region6: #{tpu_custom_call.1} parent=1 // pred_check
      _
    $region7: #{tpu_custom_call.1} parent=1 // pred_check_branch
      %21 = sbr.rel (0) target = $region9
    $region8: #{tpu_custom_call.1} parent=1 // pred_region
      %s23 = ssub.s32 2048, 2048
      %24 = vsyncadd [#allocation6], %s23
      %s25 = sshll.u32 [#allocation5], 4
      %s26 = int_to_ptr.vmem [resolvable:$true] %s25
      %31 = dma.hbm_to_vmem [thread:$0]  %s1, 2048, %s26, [#allocation6], 64, 64, 4
    $region9: #{tpu_custom_call.1} parent=1 // pred_fallthru
      _
    // Predicated region
    $region10: #{tpu_custom_call.1} parent=1 // pred_check
      _
    $region11: #{tpu_custom_call.1} parent=1 // pred_check_branch
      %33 = sbr.rel (0) target = $region13
    $region12: #{tpu_custom_call.1} parent=1 // pred_region
      %34 = dma.done [#allocation3], 128
    $region13: #{tpu_custom_call.1} parent=1 // pred_fallthru
      _
    // Predicated region
    $region14: #{tpu_custom_call.1} parent=1 // pred_check
      _
    $region15: #{tpu_custom_call.1} parent=1 // pred_check_branch
      %36 = sbr.rel (0) target = $region17
    $region16: #{tpu_custom_call.1} parent=1 // pred_region
      %37 = dma.done [#allocation6], 2048
    $region17: #{tpu_custom_call.1} parent=1 // pred_fallthru
      _
    %v39 = vld [vmem:[#allocation2] sm:$0xff]
    %v40 = vld [vmem:[#allocation5] sm:$0xf]
    %v41 = vld [vmem:[#allocation5 + $0x4] sm:$0xf]
    %v42 = vld [vmem:[#allocation5 + $0x8] sm:$0xf]
    %v43 = vld [vmem:[#allocation5 + $0xc] sm:$0xf]
    %v44 = vld [vmem:[#allocation5 + $0x10] sm:$0xf]
    %v45 = vld [vmem:[#allocation5 + $0x14] sm:$0xf]
    %v46 = vld [vmem:[#allocation5 + $0x18] sm:$0xf]
    %v47 = vld [vmem:[#allocation5 + $0x1c] sm:$0xf]
    %v48 = vld [vmem:[#allocation5 + $0x20] sm:$0xf]
    %v49 = vld [vmem:[#allocation5 + $0x24] sm:$0xf]
    %v50 = vld [vmem:[#allocation5 + $0x28] sm:$0xf]
    %v51 = vld [vmem:[#allocation5 + $0x2c] sm:$0xf]
    %v52 = vld [vmem:[#allocation5 + $0x30] sm:$0xf]
    %v53 = vld [vmem:[#allocation5 + $0x34] sm:$0xf]
    %v54 = vld [vmem:[#allocation5 + $0x38] sm:$0xf]
    %v55 = vld [vmem:[#allocation5 + $0x3c] sm:$0xf]
    %v56 = vld [vmem:[#allocation5 + $0x40] sm:$0xf]
    %v57 = vld [vmem:[#allocation5 + $0x44] sm:$0xf]
    %v58 = vld [vmem:[#allocation5 + $0x48] sm:$0xf]
    %v59 = vld [vmem:[#allocation5 + $0x4c] sm:$0xf]
    %v60 = vld [vmem:[#allocation5 + $0x50] sm:$0xf]
    %v61 = vld [vmem:[#allocation5 + $0x54] sm:$0xf]
    %v62 = vld [vmem:[#allocation5 + $0x58] sm:$0xf]
    %v63 = vld [vmem:[#allocation5 + $0x5c] sm:$0xf]
    %v64 = vld [vmem:[#allocation5 + $0x60] sm:$0xf]
    %v65 = vld [vmem:[#allocation5 + $0x64] sm:$0xf]
    %v66 = vld [vmem:[#allocation5 + $0x68] sm:$0xf]
    %v67 = vld [vmem:[#allocation5 + $0x6c] sm:$0xf]
    %v68 = vld [vmem:[#allocation5 + $0x70] sm:$0xf]
    %v69 = vld [vmem:[#allocation5 + $0x74] sm:$0xf]
    %v70 = vld [vmem:[#allocation5 + $0x78] sm:$0xf]
    %v71 = vld [vmem:[#allocation5 + $0x7c] sm:$0xf]
    %v73 = vunpack.c.l.b16 %v39
    %v74 = vunpack.c.h.b16 %v39
    %v75 = vpack.c.b16 %v73, %v73
    %v76 = vpack.c.b16 %v74, %v74
    %v111 = vunpack.c.l.b16 %v40
    %v112 = vunpack.c.l.b16 %v41
    %v113 = vunpack.c.l.b16 %v42
    %v114 = vunpack.c.l.b16 %v43
    %v115 = vunpack.c.l.b16 %v44
    %v116 = vunpack.c.l.b16 %v45
    %v117 = vunpack.c.l.b16 %v46
    %v118 = vunpack.c.l.b16 %v47
    %v119 = vunpack.c.l.b16 %v48
    %v120 = vunpack.c.l.b16 %v49
    %v121 = vunpack.c.l.b16 %v50
    %v122 = vunpack.c.l.b16 %v51
    %v123 = vunpack.c.l.b16 %v52
    %v124 = vunpack.c.l.b16 %v53
    %v125 = vunpack.c.l.b16 %v54
    %v126 = vunpack.c.l.b16 %v55
    %v127 = vunpack.c.l.b16 %v56
    %v128 = vunpack.c.l.b16 %v57
    %v129 = vunpack.c.l.b16 %v58
    %v130 = vunpack.c.l.b16 %v59
    %v131 = vunpack.c.l.b16 %v60
    %v132 = vunpack.c.l.b16 %v61
    %v133 = vunpack.c.l.b16 %v62
    %v134 = vunpack.c.l.b16 %v63
    %v135 = vunpack.c.l.b16 %v64
    %v136 = vunpack.c.l.b16 %v65
    %v137 = vunpack.c.l.b16 %v66
    %v138 = vunpack.c.l.b16 %v67
    %v139 = vunpack.c.l.b16 %v68
    %v140 = vunpack.c.l.b16 %v69
    %v141 = vunpack.c.l.b16 %v70
    %v142 = vunpack.c.l.b16 %v71
    %v143 = vpack.c.b16 %v112, %v111
    %v144 = vpack.c.b16 %v114, %v113
    %v145 = vpack.c.b16 %v116, %v115
    %v146 = vpack.c.b16 %v118, %v117
    %v147 = vpack.c.b16 %v120, %v119
    %v148 = vpack.c.b16 %v122, %v121
    %v149 = vpack.c.b16 %v124, %v123
    %v150 = vpack.c.b16 %v126, %v125
    %v151 = vpack.c.b16 %v128, %v127
    %v152 = vpack.c.b16 %v130, %v129
    %v153 = vpack.c.b16 %v132, %v131
    %v154 = vpack.c.b16 %v134, %v133
    %v155 = vpack.c.b16 %v136, %v135
    %v156 = vpack.c.b16 %v138, %v137
    %v157 = vpack.c.b16 %v140, %v139
    %v158 = vpack.c.b16 %v142, %v141
    %175 = vmatprep.subr.bf16.mxu0 0
    %176 = vmatpush1.bf16.msra.mxu0 %v143
    %177 = vmatprep.subr.bf16.mxu0 0
    %178 = vmatpush1.bf16.msra.mxu0 %v144
    %179 = vmatprep.subr.bf16.mxu0 0
    %180 = vmatpush1.bf16.msra.mxu0 %v145
    %181 = vmatprep.subr.bf16.mxu0 0
    %182 = vmatpush1.bf16.msra.mxu0 %v146
    %183 = vmatprep.subr.bf16.mxu0 0
    %184 = vmatpush1.bf16.msra.mxu0 %v147
    %185 = vmatprep.subr.bf16.mxu0 0
    %186 = vmatpush1.bf16.msra.mxu0 %v148
    %187 = vmatprep.subr.bf16.mxu0 0
    %188 = vmatpush1.bf16.msra.mxu0 %v149
    %189 = vmatprep.subr.bf16.mxu0 0
    %190 = vmatpush1.bf16.msra.mxu0 %v150
    %191 = vmatprep.subr.bf16.mxu0 0
    %192 = vmatpush1.bf16.msra.mxu0 %v151
    %193 = vmatprep.subr.bf16.mxu0 0
    %194 = vmatpush1.bf16.msra.mxu0 %v152
    %195 = vmatprep.subr.bf16.mxu0 0
    %196 = vmatpush1.bf16.msra.mxu0 %v153
    %197 = vmatprep.subr.bf16.mxu0 0
    %198 = vmatpush1.bf16.msra.mxu0 %v154
    %199 = vmatprep.subr.bf16.mxu0 0
    %200 = vmatpush1.bf16.msra.mxu0 %v155
    %201 = vmatprep.subr.bf16.mxu0 0
    %202 = vmatpush1.bf16.msra.mxu0 %v156
    %203 = vmatprep.subr.bf16.mxu0 0
    %204 = vmatpush1.bf16.msra.mxu0 %v157
    %205 = vmatprep.subr.bf16.mxu0 0
    %206 = vmatpush1.bf16.msra.mxu0 %v158
    %207 = vmatprep.mubr.bf16.mxu0 %v76
    %208 = vmatmul.mubr.bf16.gmra.mrb[0].mxu0 %v75
    %v209 = vpop.f32.mrb[0].mxu0
    %v210 = vadd.f32 0.0, %v209
    %v211 = vpop.f32.mrb[0].mxu0
    %v212 = vpop.f32.mrb[0].mxu0
    %v213 = vpop.f32.mrb[0].mxu0
    %214 = vdwg.mxu0
    %215 = vst [vmem:[#allocation7] sm:$0xff] %v210
    // Predicated region
    $region18: #{tpu_custom_call.1} parent=1 // pred_check
      _
    $region19: #{tpu_custom_call.1} parent=1 // pred_check_branch
      %217 = sbr.rel (0) target = $region21
    $region20: #{tpu_custom_call.1} parent=1 // pred_region
      %s219 = ssub.s32 128, 128
      %220 = vsyncadd [#allocation4], %s219
      %s222 = sshll.u32 [#allocation7], 4
      %s223 = int_to_ptr.vmem [resolvable:$true] %s222
      %225 = dma.vmem_to_hbm [thread:$0]  %s223, 128, %s2, [#allocation4]
    $region21: #{tpu_custom_call.1} parent=1 // pred_fallthru
      _
    // Predicated region
    $region22: #{tpu_custom_call.1} parent=1 // pred_check
      _
    $region23: #{tpu_custom_call.1} parent=1 // pred_check_branch
      %227 = sbr.rel (0) target = $region25
    $region24: #{tpu_custom_call.1} parent=1 // pred_region
      %228 = dma.done [#allocation4], 128
    $region25: #{tpu_custom_call.1} parent=1 // pred_fallthru
      _
    %229 = vsyncpa [#allocation3], 1
    %230 = vsyncpa [#allocation6], 1
    %231 = vsyncpa [#allocation4], 1

</llo_original>
